<compile_context>
chip_gen: v7x
topology: tpu7x:2x2x1
jax: 0.10.0
libtpu: 0.0.40
codegen_flags: <defaults>
</compile_context>

<pallas_src>
import functools

import jax
import jax.numpy as jnp
from jax.experimental import pallas as pl
from jax.experimental.pallas import tpu as pltpu


# ----------------------------- config (toy shapes) ---------------------------
BATCH = 2
SEQ = 8
D_MODEL = 32
D_VOCAB = 128          # multiple of 128 -> no padding needed for the toy case
INIT_RANGE = 0.02


def _round_up(x, m):
    return ((x + m - 1) // m) * m


# ----------------------------- kernel ----------------------------------------
def unembed_kernel(x_ref, w_ref, b_ref, out_ref, acc_ref):
    # Grid = (vocab_tiles, row_tiles, k_tiles). K (d_model) is the innermost
    # reduction axis: zero the f32 accumulator at k == 0, add bias and write the
    # output tile at the last K step.
    k = pl.program_id(2)

    @pl.when(k == 0)
    def _():
        acc_ref[...] = jnp.zeros_like(acc_ref)

    x = x_ref[...]
    w = w_ref[...]
    # If weights are streamed in a narrower dtype (e.g. bf16 to halve HBM
    # traffic), run the MXU in that dtype; accumulation stays f32.
    if w.dtype != x.dtype:
        x = x.astype(w.dtype)
    acc_ref[...] += jnp.dot(x, w, preferred_element_type=jnp.float32)

    @pl.when(k == pl.num_programs(2) - 1)
    def _():
        out_ref[...] = (acc_ref[...] + b_ref[...].astype(jnp.float32)).astype(out_ref.dtype)


# ----------------------------- one-time parameter prep ------------------------
def prepare_unembed_params(W_U, b_U, param_dtype=None):
    """Call ONCE at init (not per forward): pad d_vocab up to a multiple of 128
    (lane-dense, unmasked stores) and optionally cast the streamed parameters
    (bf16 halves the dominant HBM read; matmul still accumulates in f32)."""
    D, V = W_U.shape
    Vp = _round_up(V, 128)
    w = W_U
    b = b_U.reshape(1, V)
    if Vp != V:
        w = jnp.pad(w, ((0, 0), (0, Vp - V)))
        b = jnp.pad(b, ((0, 0), (0, Vp - V)))
    if param_dtype is not None:
        w = w.astype(param_dtype)
        b = b.astype(param_dtype)
    return w, b


def _pick_tiles(M, D, Vp, x_itemsize):
    # Sublane multiple depends on the activation dtype (f32:8, bf16:16, int8:32).
    sub = {4: 8, 2: 16, 1: 32}.get(x_itemsize, 8)
    tm = min(256, _round_up(M, sub))

    # Largest lane-dense vocab tile dividing the padded vocab; prefer >= 2 vocab
    # tiles so the leading "parallel" axis can shard across v7x's two TensorCores.
    tn = Vp
    for cand in (512, 256, 128):
        if Vp % cand == 0:
            tn = cand
            break
    if Vp // tn < 2:
        for cand in (256, 128):
            if Vp % cand == 0 and Vp // cand >= 2:
                tn = cand
                break

    # K (d_model) tiling only when the contraction is large, so double-buffered
    # tiles stay inside v7x's 64 MiB VMEM at realistic d_model.
    if D > 1024 and D % 512 == 0:
        tk = 512
    else:
        tk = D
    return tm, tn, tk


# ----------------------------- forward ----------------------------------------
@functools.partial(jax.jit, static_argnames=("d_vocab",))
def unembed(resid_final, w_pad, b_pad, *, d_vocab):
    B, S, D = resid_final.shape
    Dw, Vp = w_pad.shape
    assert D == Dw and Vp % 128 == 0

    M = B * S
    x2 = resid_final.reshape(M, D)

    tm, tn, tk = _pick_tiles(M, D, Vp, x2.dtype.itemsize)
    Mp = _round_up(M, tm)
    if Mp != M:
        x2 = jnp.pad(x2, ((0, Mp - M), (0, 0)))   # cheap: activations only, never W_U

    # vocab OUTER (parallel, sharded on v7x), rows inner, K innermost (reduction).
    grid = (Vp // tn, Mp // tm, pl.cdiv(D, tk))

    cost = pl.CostEstimate(
        flops=2 * Mp * D * Vp,
        transcendentals=0,
        bytes_accessed=(x2.size * x2.dtype.itemsize
                        + w_pad.size * w_pad.dtype.itemsize
                        + b_pad.size * b_pad.dtype.itemsize
                        + Mp * Vp * resid_final.dtype.itemsize),
    )

    out = pl.pallas_call(
        unembed_kernel,
        out_shape=jax.ShapeDtypeStruct((Mp, Vp), resid_final.dtype),
        grid_spec=pltpu.PrefetchScalarGridSpec(
            num_scalar_prefetch=0,
            grid=grid,
            in_specs=[
                # activation rows: change with the inner row index / K step
                pl.BlockSpec((tm, tk), lambda j, i, k: (i, k)),
                # W_U column block: constant across the inner row loop -> stays
                # resident; streamed from HBM exactly once over the whole grid
                # when there is a single row tile (decode / toy shapes).
                # (Optional knob: pipeline_mode=pl.Buffered(3) to deepen
                #  pipelining of this stream.)
                pl.BlockSpec((tk, tn), lambda j, i, k: (k, j)),
                # bias tile
                pl.BlockSpec((1, tn), lambda j, i, k: (0, j)),
            ],
            out_specs=pl.BlockSpec((tm, tn), lambda j, i, k: (i, j)),
            scratch_shapes=[pltpu.VMEM((tm, tn), jnp.float32)],
        ),
        compiler_params=pltpu.CompilerParams(
            dimension_semantics=("parallel", "parallel", "arbitrary")),
        cost_estimate=cost,
    )(x2, w_pad, b_pad)

    return out[:M, :d_vocab].reshape(B, S, d_vocab)


# ----------------------------- reference (pure JAX) ---------------------------
def unembed_ref(resid_final, W_U, b_U):
    return jnp.einsum("bpd,dv->bpv", resid_final, W_U) + b_U


# ----------------------------- main --------------------------------------------
if __name__ == "__main__":
    key = jax.random.PRNGKey(0)
    kw, kx = jax.random.split(key)

    W_U = (INIT_RANGE * jax.random.normal(kw, (D_MODEL, D_VOCAB))).astype(jnp.float32)
    b_U = jnp.zeros((D_VOCAB,), jnp.float32)
    resid_final = jax.random.normal(kx, (BATCH, SEQ, D_MODEL), dtype=jnp.float32)

    ref = unembed_ref(resid_final, W_U, b_U)

    # f32 parameters: matches the PyTorch module exactly.
    w_pad, b_pad = prepare_unembed_params(W_U, b_U)               # once, at init
    logits = jax.block_until_ready(unembed(resid_final, w_pad, b_pad, d_vocab=D_VOCAB))
    assert logits.shape == (BATCH, SEQ, D_VOCAB)
    assert not bool(jnp.isnan(logits).any())
    assert bool(jnp.allclose(logits, ref, atol=1e-5, rtol=1e-5)), "f32 mismatch vs reference"

    # bf16 weight stream (halves dominant HBM traffic), f32 MXU accumulation.
    w_bf, b_bf = prepare_unembed_params(W_U, b_U, param_dtype=jnp.bfloat16)  # once, at init
    logits_bf = jax.block_until_ready(unembed(resid_final, w_bf, b_bf, d_vocab=D_VOCAB))
    assert not bool(jnp.isnan(logits_bf).any())
    assert bool(jnp.allclose(logits_bf, ref, atol=3e-2, rtol=3e-2)), "bf16 mismatch vs reference"

    print("KERNEL_OK")
</pallas_src>

<mosaic_0001>
module attributes {stable_mosaic.version = 11 : i64} {
  func.func @unembed_kernel(%arg0: i32, %arg1: i32, %arg2: i32, %arg3: memref<16x32xf32, #tpu.memory_space<vmem>>, %arg4: memref<32x128xf32, #tpu.memory_space<vmem>>, %arg5: memref<1x128xf32, #tpu.memory_space<vmem>>, %arg6: memref<16x128xf32, #tpu.memory_space<vmem>>, %arg7: memref<16x128xf32, #tpu.memory_space<vmem>>) attributes {dimension_semantics = [#tpu.dimension_semantics<parallel>, #tpu.dimension_semantics<parallel>, #tpu.dimension_semantics<arbitrary>], iteration_bounds = array<i64: 1, 1, 1>, scalar_prefetch = 0 : i64, scratch_operands = 1 : i64, tpu.core_type = #tpu.core_type<tc>, window_params = [{transform_indices = @transform_0, window_bounds = array<i64: 16, 32>}, {transform_indices = @transform_1, window_bounds = array<i64: 32, 128>}, {transform_indices = @transform_2, window_bounds = array<i64: 1, 128>}, {transform_indices = @transform_3, window_bounds = array<i64: 16, 128>}]} {
    %c0_i32 = arith.constant 0 : i32
    %0 = arith.cmpi eq, %arg2, %c0_i32 : i32
    %1 = arith.extui %0 : i1 to i32
    %c0_i32_0 = arith.constant 0 : i32
    %2 = arith.cmpi ne, %1, %c0_i32_0 : i32
    scf.if %2 {
      %cst_10 = arith.constant 0.000000e+00 : f32
      %12 = vector.broadcast %cst_10 : f32 to vector<16x128xf32>
      %c0_11 = arith.constant 0 : index
      %c0_12 = arith.constant 0 : index
      %13 = vector.load %arg7[%c0_11, %c0_12] : memref<16x128xf32, #tpu.memory_space<vmem>>, vector<16x128xf32>
      tpu.vector_store %arg7[%c0_11, %c0_12], %12 {strides = array<i32>} : memref<16x128xf32, #tpu.memory_space<vmem>>, vector<16x128xf32>,
    } else {
    }
    %c0 = arith.constant 0 : index
    %c0_1 = arith.constant 0 : index
    %3 = vector.load %arg3[%c0, %c0_1] : memref<16x32xf32, #tpu.memory_space<vmem>>, vector<16x32xf32>
    %c0_2 = arith.constant 0 : index
    %c0_3 = arith.constant 0 : index
    %4 = vector.load %arg4[%c0_2, %c0_3] : memref<32x128xf32, #tpu.memory_space<vmem>>, vector<32x128xf32>
    %c0_4 = arith.constant 0 : index
    %c0_5 = arith.constant 0 : index
    %5 = vector.load %arg7[%c0_4, %c0_5] : memref<16x128xf32, #tpu.memory_space<vmem>>, vector<16x128xf32>
    %cst = arith.constant dense<0.000000e+00> : vector<16x128xf32>
    %6 = tpu.matmul %3, %4, %cst {dimension_numbers = #tpu.dot_dimension_numbers<[1], [0], [0], [1], [0, 0, 1, 1], [], []>} : vector<16x32xf32>, vector<32x128xf32>, vector<16x128xf32> -> vector<16x128xf32>
    %7 = arith.addf %5, %6 : vector<16x128xf32>
    %c0_6 = arith.constant 0 : index
    %c0_7 = arith.constant 0 : index
    %8 = vector.load %arg7[%c0_6, %c0_7] : memref<16x128xf32, #tpu.memory_space<vmem>>, vector<16x128xf32>
    tpu.vector_store %arg7[%c0_6, %c0_7], %7 {strides = array<i32>} : memref<16x128xf32, #tpu.memory_space<vmem>>, vector<16x128xf32>,
    %c0_i32_8 = arith.constant 0 : i32
    %9 = arith.cmpi eq, %arg2, %c0_i32_8 : i32
    %10 = arith.extui %9 : i1 to i32
    %c0_i32_9 = arith.constant 0 : i32
    %11 = arith.cmpi ne, %10, %c0_i32_9 : i32
    scf.if %11 {
      %c0_10 = arith.constant 0 : index
      %c0_11 = arith.constant 0 : index
      %12 = vector.load %arg7[%c0_10, %c0_11] : memref<16x128xf32, #tpu.memory_space<vmem>>, vector<16x128xf32>
      %c0_12 = arith.constant 0 : index
      %c0_13 = arith.constant 0 : index
      %13 = vector.load %arg5[%c0_12, %c0_13] : memref<1x128xf32, #tpu.memory_space<vmem>>, vector<1x128xf32>
      %14 = vector.broadcast %13 : vector<1x128xf32> to vector<16x128xf32>
      %15 = arith.addf %12, %14 : vector<16x128xf32>
      %c0_14 = arith.constant 0 : index
      %c0_15 = arith.constant 0 : index
      %16 = vector.load %arg6[%c0_14, %c0_15] : memref<16x128xf32, #tpu.memory_space<vmem>>, vector<16x128xf32>
      tpu.vector_store %arg6[%c0_14, %c0_15], %15 {strides = array<i32>} : memref<16x128xf32, #tpu.memory_space<vmem>>, vector<16x128xf32>,
    } else {
    }
    return
  }
  func.func @transform_0(%arg0: i32, %arg1: i32, %arg2: i32) -> (i32, i32) {
    %c0_i32 = arith.constant 0 : i32
    return %arg1, %arg2 : i32, i32
  }
  func.func @transform_1(%arg0: i32, %arg1: i32, %arg2: i32) -> (i32, i32) {
    %c0_i32 = arith.constant 0 : i32
    return %arg2, %arg0 : i32, i32
  }
  func.func @transform_2(%arg0: i32, %arg1: i32, %arg2: i32) -> (i32, i32) {
    %c0_i32 = arith.constant 0 : i32
    %c0_i32_0 = arith.constant 0 : i32
    return %c0_i32, %arg0 : i32, i32
  }
  func.func @transform_3(%arg0: i32, %arg1: i32, %arg2: i32) -> (i32, i32) {
    %c0_i32 = arith.constant 0 : i32
    return %arg1, %arg0 : i32, i32
  }
}

</mosaic_0001>

<llo_original>
// kernel: unembed.1
$region0: #{unembed.1}
  #allocation0 [shape = 'u32[]', space=smem, size = 0x4, offset = 0x4, fixed_abs, tag = 'smem constant byte address 0x4 - core index']
  #allocation1 [shape = 'u32[144,128]{1,0:T(1,128)}', space=vmem, size = 0x12000, scoped, tag = 'internal scratch']
  #allocation2 [shape = 'f32[16,128]{1,0:T(8,128)}', space=vmem, size = 0x2000, scoped, tag = 'scratch operand']
  %s0 = inlined_call_operand.hbm [shape: f32[16,32], index: 0, kind: input, shape index: {}]
  %s1 = inlined_call_operand.hbm [shape: f32[32,128], index: 1, kind: input, shape index: {}]
  %s2 = inlined_call_operand.vmem [shape: f32[1,128], index: 2, kind: input, shape index: {}]
  %s3 = inlined_call_operand.hbm [shape: f32[16,128], index: 3, kind: output, shape index: {}]
  %s4 = sld [smem:[#allocation0]]
  $region38: #{unembed.1} parent=0
    _
  %s6 = ssub.s32 1, %s4
  %s7 = scalar_select 0, %s6, %s4
  $region1: #{unembed.1} parent=0
    #allocation3 [shape = 'u8[8192]{0}', space=vmem, size = 0x2000, scoped, tag = 'input window, operand 0, single buffered']
    #allocation4 [shape = 's32[1]{0}', space=sflag, size = 0x4, scoped, tag = 'scoped memory for unembed.1']
    #allocation5 [shape = 's32[1]{0}', space=sflag, size = 0x4, scoped, tag = 'scoped memory for unembed.1']
    #allocation6 [shape = 'u8[16384]{0}', space=vmem, size = 0x4000, scoped, tag = 'input window, operand 1, single buffered']
    #allocation7 [shape = 's32[1]{0}', space=sflag, size = 0x4, scoped, tag = 'scoped memory for unembed.1']
    #allocation8 [shape = 'u8[8192]{0}', space=vmem, size = 0x2000, scoped, tag = 'output window, operand 0, single buffered']
    %8 = vsyncpa [#allocation4], 0
    %9 = vsyncpa [#allocation7], 0
    %10 = vsyncpa [#allocation5], 0
    // Predicated region
    $region2: #{unembed.1} parent=1 // pred_check
      _
    $region3: #{unembed.1} parent=1 // pred_check_branch
      %12 = sbr.rel (0) target = $region5
    $region4: #{unembed.1} parent=1 // pred_region
      %s14 = ssub.s32 256, 256
      %15 = vsyncadd [#allocation4], %s14
      %s16 = sshll.u32 [#allocation3], 4
      %s17 = int_to_ptr.vmem [resolvable:$true] %s16
      %22 = dma.hbm_to_vmem [thread:$0]  %s0, 256, %s17, [#allocation4], 128, 128, 8
    $region5: #{unembed.1} parent=1 // pred_fallthru
      _
    // Predicated region
    $region6: #{unembed.1} parent=1 // pred_check
      _
    $region7: #{unembed.1} parent=1 // pred_check_branch
      %24 = sbr.rel (0) target = $region9
    $region8: #{unembed.1} parent=1 // pred_region
      %s26 = ssub.s32 512, 512
      %27 = vsyncadd [#allocation7], %s26
      %s28 = sshll.u32 [#allocation6], 4
      %s29 = int_to_ptr.vmem [resolvable:$true] %s28
      %34 = dma.hbm_to_vmem [thread:$0]  %s1, 512, %s29, [#allocation7], 128, 128, 8
    $region9: #{unembed.1} parent=1 // pred_fallthru
      _
    // Predicated region
    $region10: #{unembed.1} parent=1 // pred_check
      _
    $region11: #{unembed.1} parent=1 // pred_check_branch
      %36 = sbr.rel (0) target = $region13
    $region12: #{unembed.1} parent=1 // pred_region
      _
    $region13: #{unembed.1} parent=1 // pred_fallthru
      _
    // Predicated region
    $region14: #{unembed.1} parent=1 // pred_check
      _
    $region15: #{unembed.1} parent=1 // pred_check_branch
      %38 = sbr.rel (0) target = $region17
    $region16: #{unembed.1} parent=1 // pred_region
      %39 = dma.done [#allocation4], 256
    $region17: #{unembed.1} parent=1 // pred_fallthru
      _
    // Predicated region
    $region18: #{unembed.1} parent=1 // pred_check
      _
    $region19: #{unembed.1} parent=1 // pred_check_branch
      %41 = sbr.rel (0) target = $region21
    $region20: #{unembed.1} parent=1 // pred_region
      %42 = dma.done [#allocation7], 512
    $region21: #{unembed.1} parent=1 // pred_fallthru
      _
    %p43 = scmp.eq.s32.totalorder 0, 0
    // Predicated region
    $region22: #{unembed.1} parent=1 // pred_check
      %p44 = pneg %p43
    $region23: #{unembed.1} parent=1 // pred_check_branch
      %46 = sbr.rel (%p44) target = $region25
    $region24: #{unembed.1} parent=1 // pred_region
      %47 = vst [vmem:[#allocation2] sm:$0xff] 0.0
      %48 = vst [vmem:[#allocation2 + $0x8] sm:$0xff] 0.0
    $region25: #{unembed.1} parent=1 // pred_fallthru
      _
    %v49 = vld [vmem:[#allocation3] sm:$0xff]
    %v50 = vld [vmem:[#allocation3 + $0x8] sm:$0xff]
    %v51 = vld [vmem:[#allocation6] sm:$0xff]
    %v52 = vld [vmem:[#allocation6 + $0x8] sm:$0xff]
    %v53 = vld [vmem:[#allocation6 + $0x10] sm:$0xff]
    %v54 = vld [vmem:[#allocation6 + $0x18] sm:$0xff]
    %v55 = vld [vmem:[#allocation2] sm:$0xff]
    %v56 = vld [vmem:[#allocation2 + $0x8] sm:$0xff]
    %vm57 = vcmask 261120
    %v59 = vsel %vm57, %v49, 0
    %v62 = vsel %vm57, %v50, 0
    %64 = vmatprep.subr.mxu0 0.0
    %65 = vmatpush1.msra.mxu0 %v51
    %66 = vmatprep.subr.mxu0 0.0
    %67 = vmatpush1.msra.mxu0 %v52
    %68 = vmatprep.subr.mxu0 0.0
    %69 = vmatpush1.msra.mxu0 %v53
    %70 = vmatprep.subr.mxu0 0.0
    %71 = vmatpush1.msra.mxu0 %v54
    %72 = vmatprep.subr.mxu0 0.0
    %73 = vmatpush1.msra.mxu0 0.0
    %74 = vmatprep.subr.mxu0 0.0
    %75 = vmatpush1.msra.mxu0 0.0
    %76 = vmatprep.subr.mxu0 0.0
    %77 = vmatpush1.msra.mxu0 0.0
    %78 = vmatprep.subr.mxu0 0.0
    %79 = vmatpush1.msra.mxu0 0.0
    %80 = vmatprep.subr.mxu0 0.0
    %81 = vmatpush1.msra.mxu0 0.0
    %82 = vmatprep.subr.mxu0 0.0
    %83 = vmatpush1.msra.mxu0 0.0
    %84 = vmatprep.subr.mxu0 0.0
    %85 = vmatpush1.msra.mxu0 0.0
    %86 = vmatprep.subr.mxu0 0.0
    %87 = vmatpush1.msra.mxu0 0.0
    %88 = vmatprep.subr.mxu0 0.0
    %89 = vmatpush1.msra.mxu0 0.0
    %90 = vmatprep.subr.mxu0 0.0
    %91 = vmatpush1.msra.mxu0 0.0
    %92 = vmatprep.subr.mxu0 0.0
    %93 = vmatpush1.msra.mxu0 0.0
    %94 = vmatprep.subr.mxu0 0.0
    %95 = vmatpush1.msra.mxu0 0.0
    %96 = vmatprep.subr.mxu0 0.0
    %97 = vmatpush1.msra.mxu0 0.0
    %98 = vmatprep.subr.mxu0 0.0
    %99 = vmatpush1.msra.mxu0 0.0
    %100 = vmatprep.subr.mxu0 0.0
    %101 = vmatpush1.msra.mxu0 0.0
    %102 = vmatprep.subr.mxu0 0.0
    %103 = vmatpush1.msra.mxu0 0.0
    %104 = vmatprep.subr.mxu0 0.0
    %105 = vmatpush1.msra.mxu0 0.0
    %106 = vmatprep.subr.mxu0 0.0
    %107 = vmatpush1.msra.mxu0 0.0
    %108 = vmatprep.subr.mxu0 0.0
    %109 = vmatpush1.msra.mxu0 0.0
    %110 = vmatprep.subr.mxu0 0.0
    %111 = vmatpush1.msra.mxu0 0.0
    %112 = vmatprep.subr.mxu0 0.0
    %113 = vmatpush1.msra.mxu0 0.0
    %114 = vmatprep.subr.mxu0 0.0
    %115 = vmatpush1.msra.mxu0 0.0
    %116 = vmatprep.subr.mxu0 0.0
    %117 = vmatpush1.msra.mxu0 0.0
    %118 = vmatprep.subr.mxu0 0.0
    %119 = vmatpush1.msra.mxu0 0.0
    %120 = vmatprep.subr.mxu0 0.0
    %121 = vmatpush1.msra.mxu0 0.0
    %122 = vmatprep.subr.mxu0 0.0
    %123 = vmatpush1.msra.mxu0 0.0
    %124 = vmatprep.subr.mxu0 0.0
    %125 = vmatpush1.msra.mxu0 0.0
    %126 = vmatprep.subr.mxu0 0.0
    %127 = vmatpush1.msra.mxu0 0.0
    %128 = vmatprep.mubr.f32.mxu0 0.0
    %129 = vmatmul.mubr.f32.gmra.mrb[0].mxu0 %v59
    %v130 = vpop.f32.mrb[0].mxu0
    %v131 = vadd.f32 0.0, %v130
    %v132 = vpop.f32.mrb[0].mxu0
    %133 = vmatprep.mubr.f32.mxu0 0.0
    %134 = vmatmul.mubr.f32.gmra.mrb[0].mxu0 %v62
    %v135 = vpop.f32.mrb[0].mxu0
    %v136 = vadd.f32 0.0, %v135
    %v137 = vpop.f32.mrb[0].mxu0
    %138 = vdwg.mxu0
    %v139 = vadd.f32 %v55, %v131
    %v140 = vadd.f32 %v56, %v136
    %141 = vst [vmem:[#allocation2] sm:$0xff] %v139
    %142 = vst [vmem:[#allocation2 + $0x8] sm:$0xff] %v140
    // Predicated region
    $region26: #{unembed.1} parent=1 // pred_check
      %p143 = pneg %p43
    $region27: #{unembed.1} parent=1 // pred_check_branch
      %145 = sbr.rel (%p143) target = $region29
    $region28: #{unembed.1} parent=1 // pred_region
      %v146 = vld [vmem:[#allocation2] sm:$0xff]
      %v147 = vld [vmem:[#allocation2 + $0x8] sm:$0xff]
      %v148 = vld [vmem:[%s2] sm:$0x1]
      %v150 = vlaneseq
      %v151 = vshrl.u32 %v150, 7
      %v152 = vsub.s32 0, %v151
      %v153 = vrot.slane %v148, %v152
      %v155 = vadd.f32 %v146, %v153
      %v156 = vadd.f32 %v147, %v153
      %157 = vst [vmem:[#allocation8] sm:$0xff] %v155
      %158 = vst [vmem:[#allocation8 + $0x8] sm:$0xff] %v156
    $region29: #{unembed.1} parent=1 // pred_fallthru
      _
    // Predicated region
    $region30: #{unembed.1} parent=1 // pred_check
      _
    $region31: #{unembed.1} parent=1 // pred_check_branch
      %160 = sbr.rel (0) target = $region33
    $region32: #{unembed.1} parent=1 // pred_region
      %s162 = ssub.s32 256, 256
      %163 = vsyncadd [#allocation5], %s162
      %s164 = sshll.u32 [#allocation8], 4
      %s165 = int_to_ptr.vmem [resolvable:$true] %s164
      %170 = dma.vmem_to_hbm [thread:$0]  %s165, 256, %s3, [#allocation5], 128, 128, 8
    $region33: #{unembed.1} parent=1 // pred_fallthru
      _
    // Predicated region
    $region34: #{unembed.1} parent=1 // pred_check
      _
    $region35: #{unembed.1} parent=1 // pred_check_branch
      %172 = sbr.rel (0) target = $region37
    $region36: #{unembed.1} parent=1 // pred_region
      %173 = dma.done [#allocation5], 256
    $region37: #{unembed.1} parent=1 // pred_fallthru
      _
    %174 = vsyncpa [#allocation4], 1
    %175 = vsyncpa [#allocation7], 1
    %176 = vsyncpa [#allocation5], 1

</llo_original>
